<compile_context>
chip_gen: v7x
topology: tpu7x:2x2x1
jax: 0.10.0
libtpu: 0.0.40
codegen_flags: <defaults>
</compile_context>

<pallas_src>
import math
import functools

import jax
import jax.numpy as jnp
from jax import lax
from jax.experimental import pallas as pl
from jax.experimental.pallas import tpu as pltpu

LN_EPS = 1e-5


# --------------------------------------------------------------------------
# In-kernel helpers
# --------------------------------------------------------------------------
def _make_patches(x, H, W, kh, kw):
    """x: (Cin, HW) f32 tile.  Returns im2col patches (kh*kw*Cin, HW) with
    patch[(di*kw+dj)*Cin + ci, i*W + j] = x[ci, (i+di-ph)*W + (j+dj-pw)]
    (zero outside the image).  Built with XLU lane rolls + VPU masks so the
    activation tile never leaves VMEM/vregs."""
    Cin, HW = x.shape
    ph, pw = kh // 2, kw // 2
    lane = lax.broadcasted_iota(jnp.int32, (Cin, HW), 1)   # flat position p
    if (W & (W - 1)) == 0:
        col = lane & (W - 1)            # power-of-two fast path (bit op)
    else:
        col = lane % W
    blocks = []
    for di in range(kh):
        for dj in range(kw):
            s = (di - ph) * W + (dj - pw)
            ddj = dj - pw
            xs = x if s == 0 else pltpu.roll(x, (-s) % HW, axis=1)
            valid = (lane + s >= 0) & (lane + s < HW)       # H boundary
            if ddj > 0:
                valid &= col < (W - ddj)                    # W boundary
            elif ddj < 0:
                valid &= col >= (-ddj)
            blocks.append(jnp.where(valid, xs, 0.0))
    return jnp.concatenate(blocks, axis=0)                  # (kh*kw*Cin, HW)


def _conv_matmul(x, w_bf16, bias, H, W, kh, kw):
    """x: (Cin, HW) f32.  w_bf16: (Cout, kh*kw*Cin) bf16.  bias: (Cout, 1) f32.
    One MXU matmul, bf16 operands / f32 accumulation."""
    patches = _make_patches(x, H, W, kh, kw).astype(jnp.bfloat16)
    y = jnp.dot(w_bf16, patches, preferred_element_type=jnp.float32)
    return y + bias


def _layernorm(y, gamma, beta):
    """Single-pass LayerNorm over the full (Cg, HW) tile (per-sample LN over
    (C, H, W)) with elementwise affine."""
    n = y.shape[0] * y.shape[1]
    s1 = jnp.sum(y)
    s2 = jnp.sum(y * y)
    mu = s1 / n
    var = s2 / n - mu * mu
    return (y - mu) * lax.rsqrt(var + LN_EPS) * gamma + beta


# --------------------------------------------------------------------------
# Kernel A: fused conv_s_next + conv_s on S_t
# --------------------------------------------------------------------------
def _s_branch_kernel(s_t_ref, w_ref, b_ref, g1_ref, bt1_ref, g3_ref, bt3_ref,
                     s_next_ref, s_concat_ref, *, H, W, kh, kw, C):
    y = _conv_matmul(s_t_ref[0], w_ref[...], b_ref[...], H, W, kh, kw)  # (4C,HW)
    s_next_ref[0] = _layernorm(y[0:C, :], g1_ref[...], bt1_ref[...])
    s_concat_ref[0] = _layernorm(y[C:, :], g3_ref[...], bt3_ref[...])


# --------------------------------------------------------------------------
# Kernel B: conv_t_next (x2, shared weights) + attention softmax + fusion gates
# --------------------------------------------------------------------------
def _fusion_kernel(t_t_ref, tt_t_ref, w_ref, b_ref, g_ref, bt_ref,
                   s_next_ref, s_att_ref, t_att_ref, tt_att_ref,
                   t_fus_ref, tt_fus_ref, *, H, W, kh, kw, tau, inv_sqrt_d):
    w = w_ref[...]
    b = b_ref[...]
    g = g_ref[...]
    bt = bt_ref[...]

    T_t = t_t_ref[0]
    TT_t = tt_t_ref[0]
    # conv_t_next on both inputs with the same resident weight tile.
    t_next = _layernorm(_conv_matmul(T_t, w, b, H, W, kh, kw), g, bt)
    tt_next = _layernorm(_conv_matmul(TT_t, w, b, H, W, kh, kw), g, bt)

    # Attention over tau past steps: softmax of global dot products.
    s_next = s_next_ref[0]
    logits = [jnp.sum(s_att_ref[i, 0] * s_next) * inv_sqrt_d for i in range(tau)]
    m = logits[0]
    for i in range(1, tau):
        m = jnp.maximum(m, logits[i])
    exps = [jnp.exp(l - m) for l in logits]
    denom = exps[0]
    for e in exps[1:]:
        denom = denom + e
    inv_denom = 1.0 / denom

    w0 = exps[0] * inv_denom
    T_trend = t_att_ref[0, 0] * w0
    TT_trend = tt_att_ref[0, 0] * w0
    for i in range(1, tau):
        w_i = exps[i] * inv_denom
        T_trend = T_trend + t_att_ref[i, 0] * w_i
        TT_trend = TT_trend + tt_att_ref[i, 0] * w_i

    t_gate = jax.nn.sigmoid(t_next)
    tt_gate = jax.nn.sigmoid(tt_next)
    t_fus_ref[0] = T_t * t_gate + (1.0 - t_gate) * T_trend
    tt_fus_ref[0] = TT_t * tt_gate + (1.0 - tt_gate) * TT_trend


# --------------------------------------------------------------------------
# Kernel C: conv_t on T_fusion + LayerNorm + full output gating epilogue
# --------------------------------------------------------------------------
def _output_kernel(t_fus_ref, w_ref, b_ref, g_ref, bt_ref,
                   s_concat_ref, tt_fus_ref, s_t_ref,
                   t_new_ref, s_new_ref, *, H, W, kh, kw, C, residual):
    y = _conv_matmul(t_fus_ref[0], w_ref[...], b_ref[...], H, W, kh, kw)  # (3C,HW)
    T_concat = _layernorm(y, g_ref[...], bt_ref[...])
    S_concat = s_concat_ref[0]

    # torch.split(..., num_hidden, dim=1) done as static sublane slices.
    t_g, t_t_, t_s = T_concat[0:C], T_concat[C:2 * C], T_concat[2 * C:3 * C]
    s_g, s_t_, s_s = S_concat[0:C], S_concat[C:2 * C], S_concat[2 * C:3 * C]

    T_gate = jax.nn.sigmoid(t_g)
    S_gate = jax.nn.sigmoid(s_g)
    TT_f = tt_fus_ref[0]
    TT_gate = jax.nn.sigmoid(TT_f)
    T_new = T_gate * t_t_ + (1.0 - T_gate) * s_t_
    S_new = S_gate * s_s + (1.0 - S_gate) * t_s
    S_new = S_new * (1.0 - TT_gate) + TT_gate * TT_f
    if residual:
        S_new = S_new + s_t_ref[0]
    t_new_ref[0] = T_new
    s_new_ref[0] = S_new


# --------------------------------------------------------------------------
# Wrapper
# --------------------------------------------------------------------------
def _w_mat(w):
    """(Cout, Cin, kh, kw) torch OIHW -> (Cout, kh*kw*Cin) bf16, ordered to
    match _make_patches (patch index = (di*kw+dj)*Cin + ci)."""
    Cout = w.shape[0]
    return jnp.transpose(w, (0, 2, 3, 1)).reshape(Cout, -1).astype(jnp.bfloat16)


def mau_cell_forward(params, T_t, T_T_t, S_t, t_att, t_t_att, s_att,
                     num_hidden, height, width, filter_size, tau, cell_mode):
    assert cell_mode in ('residual', 'normal')
    B = T_t.shape[0]
    C = num_hidden
    assert T_t.shape[1] == C, "MAUCell fusion gating requires in_channel == num_hidden"
    H, W = height, width
    HW = H * W
    kh, kw = filter_size
    K = kh * kw * C
    d = num_hidden * height * width
    f32 = jnp.float32

    # NCHW -> (B, C, HW): free reshapes (no transposes); HW lands on lanes.
    T_t_f = T_t.reshape(B, C, HW)
    TT_t_f = T_T_t.reshape(B, C, HW)
    S_t_f = S_t.reshape(B, C, HW)
    t_att_f = t_att.reshape(tau, B, C, HW)
    tt_att_f = t_t_att.reshape(tau, B, C, HW)
    s_att_f = s_att.reshape(tau, B, C, HW)

    # Parameter packing (tiny; in a recurrent model hoist this out of the
    # time loop and do it once).
    w_sn, b_sn, g_sn, bt_sn = params['conv_s_next']
    w_s, b_s, g_s, bt_s = params['conv_s']
    w_tn, b_tn, g_tn, bt_tn = params['conv_t_next']
    w_t, b_t, g_t, bt_t = params['conv_t']

    w_s_cat = jnp.concatenate([_w_mat(w_sn), _w_mat(w_s)], axis=0)        # (4C, K)
    b_s_cat = jnp.concatenate([b_sn, b_s], axis=0).reshape(4 * C, 1).astype(f32)

    def row_spec(nc):
        return pl.BlockSpec((1, nc, HW), lambda b: (b, 0, 0))

    def full_spec(shape):
        return pl.BlockSpec(shape, lambda b, _s=shape: (0,) * len(_s))

    spec_x = row_spec(C)
    spec_att = pl.BlockSpec((tau, 1, C, HW), lambda b: (0, b, 0, 0))
    cparams = pltpu.CompilerParams(dimension_semantics=("parallel",))

    # ---- Call A: fused conv_s_next + conv_s on S_t ----
    s_next_f, S_concat_f = pl.pallas_call(
        functools.partial(_s_branch_kernel, H=H, W=W, kh=kh, kw=kw, C=C),
        out_shape=(jax.ShapeDtypeStruct((B, C, HW), f32),
                   jax.ShapeDtypeStruct((B, 3 * C, HW), f32)),
        grid=(B,),
        in_specs=[spec_x,
                  full_spec((4 * C, K)), full_spec((4 * C, 1)),
                  full_spec((C, HW)), full_spec((C, HW)),
                  full_spec((3 * C, HW)), full_spec((3 * C, HW))],
        out_specs=(spec_x, row_spec(3 * C)),
        compiler_params=cparams,
    )(S_t_f, w_s_cat, b_s_cat,
      g_sn.reshape(C, HW), bt_sn.reshape(C, HW),
      g_s.reshape(3 * C, HW), bt_s.reshape(3 * C, HW))

    # ---- Call B: conv_t_next (x2) + attention + fusion gating ----
    T_fusion_f, TT_fusion_f = pl.pallas_call(
        functools.partial(_fusion_kernel, H=H, W=W, kh=kh, kw=kw, tau=tau,
                          inv_sqrt_d=1.0 / math.sqrt(d)),
        out_shape=(jax.ShapeDtypeStruct((B, C, HW), f32),
                   jax.ShapeDtypeStruct((B, C, HW), f32)),
        grid=(B,),
        in_specs=[spec_x, spec_x,
                  full_spec((C, K)), full_spec((C, 1)),
                  full_spec((C, HW)), full_spec((C, HW)),
                  spec_x,
                  spec_att, spec_att, spec_att],
        out_specs=(spec_x, spec_x),
        compiler_params=cparams,
    )(T_t_f, TT_t_f, _w_mat(w_tn), b_tn.reshape(C, 1).astype(f32),
      g_tn.reshape(C, HW), bt_tn.reshape(C, HW),
      s_next_f, s_att_f, t_att_f, tt_att_f)

    # ---- Call C: conv_t on T_fusion + output gating epilogue ----
    T_new_f, S_new_f = pl.pallas_call(
        functools.partial(_output_kernel, H=H, W=W, kh=kh, kw=kw, C=C,
                          residual=(cell_mode == 'residual')),
        out_shape=(jax.ShapeDtypeStruct((B, C, HW), f32),
                   jax.ShapeDtypeStruct((B, C, HW), f32)),
        grid=(B,),
        in_specs=[spec_x,
                  full_spec((3 * C, K)), full_spec((3 * C, 1)),
                  full_spec((3 * C, HW)), full_spec((3 * C, HW)),
                  row_spec(3 * C), spec_x, spec_x],
        out_specs=(spec_x, spec_x),
        compiler_params=cparams,
    )(T_fusion_f, _w_mat(w_t), b_t.reshape(3 * C, 1).astype(f32),
      g_t.reshape(3 * C, HW), bt_t.reshape(3 * C, HW),
      S_concat_f, TT_fusion_f, S_t_f)

    shape4 = (B, C, H, W)
    return (T_new_f.reshape(shape4), S_new_f.reshape(shape4),
            TT_fusion_f.reshape(shape4))


# --------------------------- pure-JAX reference ---------------------------
def reference_forward(params, T_t, T_T_t, S_t, t_att, t_t_att, s_att,
                      num_hidden, height, width, filter_size, tau, cell_mode):
    kh, kw = filter_size
    ph, pw = kh // 2, kw // 2

    def rnd(x):  # mirror the kernel's bf16 MXU operands (f32 accumulation)
        return x.astype(jnp.bfloat16).astype(jnp.float32)

    def conv_ln(x, w, b, g, bt):
        y = lax.conv_general_dilated(rnd(x), rnd(w), (1, 1), [(ph, ph), (pw, pw)],
                                     dimension_numbers=('NCHW', 'OIHW', 'NCHW'),
                                     precision=lax.Precision.HIGHEST)
        y = y + b[None, :, None, None]
        mu = y.mean(axis=(1, 2, 3), keepdims=True)
        var = ((y - mu) ** 2).mean(axis=(1, 2, 3), keepdims=True)
        return (y - mu) / jnp.sqrt(var + LN_EPS) * g[None] + bt[None]

    d = num_hidden * height * width
    s_next = conv_ln(S_t, *params['conv_s_next'])
    t_next = conv_ln(T_t, *params['conv_t_next'])
    t_t_next = conv_ln(T_T_t, *params['conv_t_next'])
    wl = jnp.stack([jnp.sum(s_att[i] * s_next, axis=(1, 2, 3)) / math.sqrt(d)
                    for i in range(tau)], axis=0)
    wl = wl.reshape(tau, -1, 1, 1, 1)
    wl = jax.nn.softmax(wl, axis=0)
    T_trend = jnp.sum(t_att * wl, axis=0)
    T_T_trend = jnp.sum(t_t_att * wl, axis=0)
    t_att_gate = jax.nn.sigmoid(t_next)
    t_t_att_gate = jax.nn.sigmoid(t_t_next)
    T_fusion = T_t * t_att_gate + (1 - t_att_gate) * T_trend
    T_T_fusion = T_T_t * t_t_att_gate + (1 - t_t_att_gate) * T_T_trend
    T_concat = conv_ln(T_fusion, *params['conv_t'])
    S_concat = conv_ln(S_t, *params['conv_s'])
    t_g, t_t_, t_s = jnp.split(T_concat, 3, axis=1)
    s_g, s_t_, s_s = jnp.split(S_concat, 3, axis=1)
    T_gate = jax.nn.sigmoid(t_g)
    S_gate = jax.nn.sigmoid(s_g)
    T_T_gate = jax.nn.sigmoid(T_T_fusion)
    T_new = T_gate * t_t_ + (1 - T_gate) * s_t_
    S_new = S_gate * s_s + (1 - S_gate) * t_s
    S_new = S_new * (1 - T_T_gate) + T_T_gate * T_T_fusion
    if cell_mode == 'residual':
        S_new = S_new + S_t
    return T_new, S_new, T_T_fusion


if __name__ == "__main__":
    B = 2
    in_channel = num_hidden = 8
    H = W = 16                      # HW = 256 -> lane-dense
    filter_size = (3, 3)
    tau = 4
    cell_mode = 'residual'
    kh, kw = filter_size

    key = jax.random.PRNGKey(0)
    ks = jax.random.split(key, 20)

    def conv_params(out_c, in_c, hh, ww, perturb_key):
        k1, k2, k3, k4 = jax.random.split(perturb_key, 4)
        w = 0.1 * jax.random.normal(k1, (out_c, in_c, kh, kw), jnp.float32)
        b = 0.1 * jax.random.normal(k2, (out_c,), jnp.float32)
        g = 1.0 + 0.1 * jax.random.normal(k3, (out_c, hh, ww), jnp.float32)
        bt = 0.1 * jax.random.normal(k4, (out_c, hh, ww), jnp.float32)
        return (w, b, g, bt)

    params = {
        'conv_t': conv_params(3 * num_hidden, in_channel, H, W, ks[0]),
        'conv_t_next': conv_params(num_hidden, in_channel, H, W, ks[1]),
        'conv_s': conv_params(3 * num_hidden, num_hidden, H, W, ks[2]),
        'conv_s_next': conv_params(num_hidden, num_hidden, H, W, ks[3]),
    }

    T_t = jax.random.normal(ks[10], (B, in_channel, H, W), jnp.float32)
    T_T_t = jax.random.normal(ks[11], (B, in_channel, H, W), jnp.float32)
    S_t = jax.random.normal(ks[12], (B, num_hidden, H, W), jnp.float32)
    t_att = jax.random.normal(ks[13], (tau, B, num_hidden, H, W), jnp.float32)
    t_t_att = jax.random.normal(ks[14], (tau, B, num_hidden, H, W), jnp.float32)
    s_att = jax.random.normal(ks[15], (tau, B, num_hidden, H, W), jnp.float32)

    outs = mau_cell_forward(params, T_t, T_T_t, S_t, t_att, t_t_att, s_att,
                            num_hidden, H, W, filter_size, tau, cell_mode)
    outs = jax.block_until_ready(outs)

    refs = reference_forward(params, T_t, T_T_t, S_t, t_att, t_t_att, s_att,
                             num_hidden, H, W, filter_size, tau, cell_mode)
    refs = jax.block_until_ready(refs)

    names = ("T_new", "S_new", "T_T_fusion")
    for name, a, r in zip(names, outs, refs):
        if not jnp.allclose(a, r, atol=2e-3, rtol=2e-3):
            raise AssertionError(f"mismatch in {name}: max abs diff "
                                 f"{float(jnp.max(jnp.abs(a - r)))}")
    print("KERNEL_OK")
</pallas_src>

<mosaic_0001>
module attributes {stable_mosaic.version = 11 : i64} {
  func.func @_s_branch_kernel(%arg0: i32, %arg1: memref<1x8x256xf32, #tpu.memory_space<vmem>>, %arg2: memref<32x72xbf16, #tpu.memory_space<vmem>>, %arg3: memref<32x1xf32, #tpu.memory_space<vmem>>, %arg4: memref<8x256xf32, #tpu.memory_space<vmem>>, %arg5: memref<8x256xf32, #tpu.memory_space<vmem>>, %arg6: memref<24x256xf32, #tpu.memory_space<vmem>>, %arg7: memref<24x256xf32, #tpu.memory_space<vmem>>, %arg8: memref<1x8x256xf32, #tpu.memory_space<vmem>>, %arg9: memref<1x24x256xf32, #tpu.memory_space<vmem>>) attributes {dimension_semantics = [#tpu.dimension_semantics<parallel>], iteration_bounds = array<i64: 2>, scalar_prefetch = 0 : i64, scratch_operands = 0 : i64, tpu.core_type = #tpu.core_type<tc>, window_params = [{transform_indices = @transform_0, window_bounds = array<i64: 1, 8, 256>}, {pipeline_mode = #tpu.pipeline_mode<synchronous>, transform_indices = @transform_1, window_bounds = array<i64: 32, 72>}, {pipeline_mode = #tpu.pipeline_mode<synchronous>, transform_indices = @transform_2, window_bounds = array<i64: 32, 1>}, {pipeline_mode = #tpu.pipeline_mode<synchronous>, transform_indices = @transform_3, window_bounds = array<i64: 8, 256>}, {pipeline_mode = #tpu.pipeline_mode<synchronous>, transform_indices = @transform_4, window_bounds = array<i64: 8, 256>}, {pipeline_mode = #tpu.pipeline_mode<synchronous>, transform_indices = @transform_5, window_bounds = array<i64: 24, 256>}, {pipeline_mode = #tpu.pipeline_mode<synchronous>, transform_indices = @transform_6, window_bounds = array<i64: 24, 256>}, {transform_indices = @transform_7, window_bounds = array<i64: 1, 8, 256>}, {transform_indices = @transform_8, window_bounds = array<i64: 1, 24, 256>}]} {
    %c0 = arith.constant 0 : index
    %c0_0 = arith.constant 0 : index
    %c0_1 = arith.constant 0 : index
    %0 = vector.load %arg1[%c0, %c0_0, %c0_1] : memref<1x8x256xf32, #tpu.memory_space<vmem>>, vector<1x8x256xf32>
    %1 = vector.shape_cast %0 : vector<1x8x256xf32> to vector<8x256xf32>
    %c0_2 = arith.constant 0 : index
    %c0_3 = arith.constant 0 : index
    %2 = vector.load %arg2[%c0_2, %c0_3] : memref<32x72xbf16, #tpu.memory_space<vmem>>, vector<32x72xbf16>
    %c0_4 = arith.constant 0 : index
    %c0_5 = arith.constant 0 : index
    %3 = vector.load %arg3[%c0_4, %c0_5] : memref<32x1xf32, #tpu.memory_space<vmem>>, vector<32x1xf32>
    %4 = tpu.iota {dimensions = array<i32: 1>} : vector<8x256xi32>
    %c15_i32 = arith.constant 15 : i32
    %5 = vector.broadcast %c15_i32 : i32 to vector<8x256xi32>
    %6 = arith.andi %4, %5 : vector<8x256xi32>
    %c17_i32 = arith.constant 17 : i32
    %7 = tpu.dynamic_rotate %1 by %c17_i32 dim 1 : vector<8x256xf32>, i32 -> vector<8x256xf32>
    %c-17_i32 = arith.constant -17 : i32
    %8 = vector.broadcast %c-17_i32 : i32 to vector<8x256xi32>
    %9 = arith.addi %4, %8 : vector<8x256xi32>
    %c0_i32 = arith.constant 0 : i32
    %10 = vector.broadcast %c0_i32 : i32 to vector<8x256xi32>
    %11 = arith.cmpi sge, %9, %10 : vector<8x256xi32>
    %c-17_i32_6 = arith.constant -17 : i32
    %12 = vector.broadcast %c-17_i32_6 : i32 to vector<8x256xi32>
    %13 = arith.addi %4, %12 : vector<8x256xi32>
    %c256_i32 = arith.constant 256 : i32
    %14 = vector.broadcast %c256_i32 : i32 to vector<8x256xi32>
    %15 = arith.cmpi slt, %13, %14 : vector<8x256xi32>
    %16 = arith.andi %11, %15 : vector<8x256xi1>
    %c1_i32 = arith.constant 1 : i32
    %17 = vector.broadcast %c1_i32 : i32 to vector<8x256xi32>
    %18 = arith.cmpi sge, %6, %17 : vector<8x256xi32>
    %19 = arith.andi %16, %18 : vector<8x256xi1>
    %cst = arith.constant 0.000000e+00 : f32
    %20 = vector.broadcast %cst : f32 to vector<8x256xf32>
    %21 = arith.select %19, %7, %20 : vector<8x256xi1>, vector<8x256xf32>
    %c16_i32 = arith.constant 16 : i32
    %22 = tpu.dynamic_rotate %1 by %c16_i32 dim 1 : vector<8x256xf32>, i32 -> vector<8x256xf32>
    %c-16_i32 = arith.constant -16 : i32
    %23 = vector.broadcast %c-16_i32 : i32 to vector<8x256xi32>
    %24 = arith.addi %4, %23 : vector<8x256xi32>
    %c0_i32_7 = arith.constant 0 : i32
    %25 = vector.broadcast %c0_i32_7 : i32 to vector<8x256xi32>
    %26 = arith.cmpi sge, %24, %25 : vector<8x256xi32>
    %c-16_i32_8 = arith.constant -16 : i32
    %27 = vector.broadcast %c-16_i32_8 : i32 to vector<8x256xi32>
    %28 = arith.addi %4, %27 : vector<8x256xi32>
    %c256_i32_9 = arith.constant 256 : i32
    %29 = vector.broadcast %c256_i32_9 : i32 to vector<8x256xi32>
    %30 = arith.cmpi slt, %28, %29 : vector<8x256xi32>
    %31 = arith.andi %26, %30 : vector<8x256xi1>
    %cst_10 = arith.constant 0.000000e+00 : f32
    %32 = vector.broadcast %cst_10 : f32 to vector<8x256xf32>
    %33 = arith.select %31, %22, %32 : vector<8x256xi1>, vector<8x256xf32>
    %c15_i32_11 = arith.constant 15 : i32
    %34 = tpu.dynamic_rotate %1 by %c15_i32_11 dim 1 : vector<8x256xf32>, i32 -> vector<8x256xf32>
    %c-15_i32 = arith.constant -15 : i32
    %35 = vector.broadcast %c-15_i32 : i32 to vector<8x256xi32>
    %36 = arith.addi %4, %35 : vector<8x256xi32>
    %c0_i32_12 = arith.constant 0 : i32
    %37 = vector.broadcast %c0_i32_12 : i32 to vector<8x256xi32>
    %38 = arith.cmpi sge, %36, %37 : vector<8x256xi32>
    %c-15_i32_13 = arith.constant -15 : i32
    %39 = vector.broadcast %c-15_i32_13 : i32 to vector<8x256xi32>
    %40 = arith.addi %4, %39 : vector<8x256xi32>
    %c256_i32_14 = arith.constant 256 : i32
    %41 = vector.broadcast %c256_i32_14 : i32 to vector<8x256xi32>
    %42 = arith.cmpi slt, %40, %41 : vector<8x256xi32>
    %43 = arith.andi %38, %42 : vector<8x256xi1>
    %c15_i32_15 = arith.constant 15 : i32
    %44 = vector.broadcast %c15_i32_15 : i32 to vector<8x256xi32>
    %45 = arith.cmpi slt, %6, %44 : vector<8x256xi32>
    %46 = arith.andi %43, %45 : vector<8x256xi1>
    %cst_16 = arith.constant 0.000000e+00 : f32
    %47 = vector.broadcast %cst_16 : f32 to vector<8x256xf32>
    %48 = arith.select %46, %34, %47 : vector<8x256xi1>, vector<8x256xf32>
    %c1_i32_17 = arith.constant 1 : i32
    %49 = tpu.dynamic_rotate %1 by %c1_i32_17 dim 1 : vector<8x256xf32>, i32 -> vector<8x256xf32>
    %c-1_i32 = arith.constant -1 : i32
    %50 = vector.broadcast %c-1_i32 : i32 to vector<8x256xi32>
    %51 = arith.addi %4, %50 : vector<8x256xi32>
    %c0_i32_18 = arith.constant 0 : i32
    %52 = vector.broadcast %c0_i32_18 : i32 to vector<8x256xi32>
    %53 = arith.cmpi sge, %51, %52 : vector<8x256xi32>
    %c-1_i32_19 = arith.constant -1 : i32
    %54 = vector.broadcast %c-1_i32_19 : i32 to vector<8x256xi32>
    %55 = arith.addi %4, %54 : vector<8x256xi32>
    %c256_i32_20 = arith.constant 256 : i32
    %56 = vector.broadcast %c256_i32_20 : i32 to vector<8x256xi32>
    %57 = arith.cmpi slt, %55, %56 : vector<8x256xi32>
    %58 = arith.andi %53, %57 : vector<8x256xi1>
    %c1_i32_21 = arith.constant 1 : i32
    %59 = vector.broadcast %c1_i32_21 : i32 to vector<8x256xi32>
    %60 = arith.cmpi sge, %6, %59 : vector<8x256xi32>
    %61 = arith.andi %58, %60 : vector<8x256xi1>
    %cst_22 = arith.constant 0.000000e+00 : f32
    %62 = vector.broadcast %cst_22 : f32 to vector<8x256xf32>
    %63 = arith.select %61, %49, %62 : vector<8x256xi1>, vector<8x256xf32>
    %c0_i32_23 = arith.constant 0 : i32
    %64 = vector.broadcast %c0_i32_23 : i32 to vector<8x256xi32>
    %65 = arith.addi %4, %64 : vector<8x256xi32>
    %c0_i32_24 = arith.constant 0 : i32
    %66 = vector.broadcast %c0_i32_24 : i32 to vector<8x256xi32>
    %67 = arith.cmpi sge, %65, %66 : vector<8x256xi32>
    %c0_i32_25 = arith.constant 0 : i32
    %68 = vector.broadcast %c0_i32_25 : i32 to vector<8x256xi32>
    %69 = arith.addi %4, %68 : vector<8x256xi32>
    %c256_i32_26 = arith.constant 256 : i32
    %70 = vector.broadcast %c256_i32_26 : i32 to vector<8x256xi32>
    %71 = arith.cmpi slt, %69, %70 : vector<8x256xi32>
    %72 = arith.andi %67, %71 : vector<8x256xi1>
    %cst_27 = arith.constant 0.000000e+00 : f32
    %73 = vector.broadcast %cst_27 : f32 to vector<8x256xf32>
    %74 = arith.select %72, %1, %73 : vector<8x256xi1>, vector<8x256xf32>
    %c255_i32 = arith.constant 255 : i32
    %75 = tpu.dynamic_rotate %1 by %c255_i32 dim 1 : vector<8x256xf32>, i32 -> vector<8x256xf32>
    %c1_i32_28 = arith.constant 1 : i32
    %76 = vector.broadcast %c1_i32_28 : i32 to vector<8x256xi32>
    %77 = arith.addi %4, %76 : vector<8x256xi32>
    %c0_i32_29 = arith.constant 0 : i32
    %78 = vector.broadcast %c0_i32_29 : i32 to vector<8x256xi32>
    %79 = arith.cmpi sge, %77, %78 : vector<8x256xi32>
    %c1_i32_30 = arith.constant 1 : i32
    %80 = vector.broadcast %c1_i32_30 : i32 to vector<8x256xi32>
    %81 = arith.addi %4, %80 : vector<8x256xi32>
    %c256_i32_31 = arith.constant 256 : i32
    %82 = vector.broadcast %c256_i32_31 : i32 to vector<8x256xi32>
    %83 = arith.cmpi slt, %81, %82 : vector<8x256xi32>
    %84 = arith.andi %79, %83 : vector<8x256xi1>
    %c15_i32_32 = arith.constant 15 : i32
    %85 = vector.broadcast %c15_i32_32 : i32 to vector<8x256xi32>
    %86 = arith.cmpi slt, %6, %85 : vector<8x256xi32>
    %87 = arith.andi %84, %86 : vector<8x256xi1>
    %cst_33 = arith.constant 0.000000e+00 : f32
    %88 = vector.broadcast %cst_33 : f32 to vector<8x256xf32>
    %89 = arith.select %87, %75, %88 : vector<8x256xi1>, vector<8x256xf32>
    %c241_i32 = arith.constant 241 : i32
    %90 = tpu.dynamic_rotate %1 by %c241_i32 dim 1 : vector<8x256xf32>, i32 -> vector<8x256xf32>
    %c15_i32_34 = arith.constant 15 : i32
    %91 = vector.broadcast %c15_i32_34 : i32 to vector<8x256xi32>
    %92 = arith.addi %4, %91 : vector<8x256xi32>
    %c0_i32_35 = arith.constant 0 : i32
    %93 = vector.broadcast %c0_i32_35 : i32 to vector<8x256xi32>
    %94 = arith.cmpi sge, %92, %93 : vector<8x256xi32>
    %c15_i32_36 = arith.constant 15 : i32
    %95 = vector.broadcast %c15_i32_36 : i32 to vector<8x256xi32>
    %96 = arith.addi %4, %95 : vector<8x256xi32>
    %c256_i32_37 = arith.constant 256 : i32
    %97 = vector.broadcast %c256_i32_37 : i32 to vector<8x256xi32>
    %98 = arith.cmpi slt, %96, %97 : vector<8x256xi32>
    %99 = arith.andi %94, %98 : vector<8x256xi1>
    %c1_i32_38 = arith.constant 1 : i32
    %100 = vector.broadcast %c1_i32_38 : i32 to vector<8x256xi32>
    %101 = arith.cmpi sge, %6, %100 : vector<8x256xi32>
    %102 = arith.andi %99, %101 : vector<8x256xi1>
    %cst_39 = arith.constant 0.000000e+00 : f32
    %103 = vector.broadcast %cst_39 : f32 to vector<8x256xf32>
    %104 = arith.select %102, %90, %103 : vector<8x256xi1>, vector<8x256xf32>
    %c240_i32 = arith.constant 240 : i32
    %105 = tpu.dynamic_rotate %1 by %c240_i32 dim 1 : vector<8x256xf32>, i32 -> vector<8x256xf32>
    %c16_i32_40 = arith.constant 16 : i32
    %106 = vector.broadcast %c16_i32_40 : i32 to vector<8x256xi32>
    %107 = arith.addi %4, %106 : vector<8x256xi32>
    %c0_i32_41 = arith.constant 0 : i32
    %108 = vector.broadcast %c0_i32_41 : i32 to vector<8x256xi32>
    %109 = arith.cmpi sge, %107, %108 : vector<8x256xi32>
    %c16_i32_42 = arith.constant 16 : i32
    %110 = vector.broadcast %c16_i32_42 : i32 to vector<8x256xi32>
    %111 = arith.addi %4, %110 : vector<8x256xi32>
    %c256_i32_43 = arith.constant 256 : i32
    %112 = vector.broadcast %c256_i32_43 : i32 to vector<8x256xi32>
    %113 = arith.cmpi slt, %111, %112 : vector<8x256xi32>
    %114 = arith.andi %109, %113 : vector<8x256xi1>
    %cst_44 = arith.constant 0.000000e+00 : f32
    %115 = vector.broadcast %cst_44 : f32 to vector<8x256xf32>
    %116 = arith.select %114, %105, %115 : vector<8x256xi1>, vector<8x256xf32>
    %c239_i32 = arith.constant 239 : i32
    %117 = tpu.dynamic_rotate %1 by %c239_i32 dim 1 : vector<8x256xf32>, i32 -> vector<8x256xf32>
    %c17_i32_45 = arith.constant 17 : i32
    %118 = vector.broadcast %c17_i32_45 : i32 to vector<8x256xi32>
    %119 = arith.addi %4, %118 : vector<8x256xi32>
    %c0_i32_46 = arith.constant 0 : i32
    %120 = vector.broadcast %c0_i32_46 : i32 to vector<8x256xi32>
    %121 = arith.cmpi sge, %119, %120 : vector<8x256xi32>
    %c17_i32_47 = arith.constant 17 : i32
    %122 = vector.broadcast %c17_i32_47 : i32 to vector<8x256xi32>
    %123 = arith.addi %4, %122 : vector<8x256xi32>
    %c256_i32_48 = arith.constant 256 : i32
    %124 = vector.broadcast %c256_i32_48 : i32 to vector<8x256xi32>
    %125 = arith.cmpi slt, %123, %124 : vector<8x256xi32>
    %126 = arith.andi %121, %125 : vector<8x256xi1>
    %c15_i32_49 = arith.constant 15 : i32
    %127 = vector.broadcast %c15_i32_49 : i32 to vector<8x256xi32>
    %128 = arith.cmpi slt, %6, %127 : vector<8x256xi32>
    %129 = arith.andi %126, %128 : vector<8x256xi1>
    %cst_50 = arith.constant 0.000000e+00 : f32
    %130 = vector.broadcast %cst_50 : f32 to vector<8x256xf32>
    %131 = arith.select %129, %117, %130 : vector<8x256xi1>, vector<8x256xf32>
    %132 = tpu.concatenate %21, %33, %48, %63, %74, %89, %104, %116, %131 in 0 : vector<8x256xf32>, vector<8x256xf32>, vector<8x256xf32>, vector<8x256xf32>, vector<8x256xf32>, vector<8x256xf32>, vector<8x256xf32>, vector<8x256xf32>, vector<8x256xf32> -> vector<72x256xf32>
    %133 = arith.truncf %132 : vector<72x256xf32> to vector<72x256xbf16>
    %cst_51 = arith.constant dense<0.000000e+00> : vector<32x256xf32>
    %134 = tpu.matmul %2, %133, %cst_51 {dimension_numbers = #tpu.dot_dimension_numbers<[1], [0], [0], [1], [0, 0, 1, 1], [], []>} : vector<32x72xbf16>, vector<72x256xbf16>, vector<32x256xf32> -> vector<32x256xf32>
    %135 = vector.broadcast %3 : vector<32x1xf32> to vector<32x256xf32>
    %136 = arith.addf %134, %135 : vector<32x256xf32>
    %137 = vector.extract_strided_slice %136 {offsets = [0, 0], sizes = [8, 256], strides = [1, 1]} : vector<32x256xf32> to vector<8x256xf32>
    %c0_52 = arith.constant 0 : index
    %c0_53 = arith.constant 0 : index
    %138 = vector.load %arg4[%c0_52, %c0_53] : memref<8x256xf32, #tpu.memory_space<vmem>>, vector<8x256xf32>
    %c0_54 = arith.constant 0 : index
    %c0_55 = arith.constant 0 : index
    %139 = vector.load %arg5[%c0_54, %c0_55] : memref<8x256xf32, #tpu.memory_space<vmem>>, vector<8x256xf32>
    %140 = vector.shape_cast %137 : vector<8x256xf32> to vector<1x8x256xf32>
    %cst_56 = arith.constant dense<0.000000e+00> : vector<1xf32>
    %141 = vector.multi_reduction <add>, %140, %cst_56 [1, 2] : vector<1x8x256xf32> to vector<1xf32>
    %142 = vector.shape_cast %141 : vector<1xf32> to vector<1x1x1xf32>
    %143 = vector.extract %142[0, 0, 0] : f32 from vector<1x1x1xf32>
    %144 = arith.mulf %137, %137 : vector<8x256xf32>
    %145 = vector.shape_cast %144 : vector<8x256xf32> to vector<1x8x256xf32>
    %cst_57 = arith.constant dense<0.000000e+00> : vector<1xf32>
    %146 = vector.multi_reduction <add>, %145, %cst_57 [1, 2] : vector<1x8x256xf32> to vector<1xf32>
    %147 = vector.shape_cast %146 : vector<1xf32> to vector<1x1x1xf32>
    %148 = vector.extract %147[0, 0, 0] : f32 from vector<1x1x1xf32>
    %cst_58 = arith.constant 2.048000e+03 : f32
    %149 = arith.divf %143, %cst_58 : f32
    %cst_59 = arith.constant 2.048000e+03 : f32
    %150 = arith.divf %148, %cst_59 : f32
    %151 = arith.mulf %149, %149 : f32
    %152 = arith.subf %150, %151 : f32
    %153 = vector.broadcast %149 : f32 to vector<8x256xf32>
    %154 = arith.subf %137, %153 : vector<8x256xf32>
    %cst_60 = arith.constant 9.99999974E-6 : f32
    %155 = arith.addf %152, %cst_60 : f32
    %156 = math.rsqrt %155 : f32
    %157 = vector.broadcast %156 : f32 to vector<8x256xf32>
    %158 = arith.mulf %154, %157 : vector<8x256xf32>
    %159 = arith.mulf %158, %138 : vector<8x256xf32>
    %160 = arith.addf %159, %139 : vector<8x256xf32>
    %c0_61 = arith.constant 0 : index
    %c0_62 = arith.constant 0 : index
    %c0_63 = arith.constant 0 : index
    %161 = vector.load %arg8[%c0_61, %c0_62, %c0_63] : memref<1x8x256xf32, #tpu.memory_space<vmem>>, vector<1x8x256xf32>
    %162 = vector.shape_cast %161 : vector<1x8x256xf32> to vector<8x256xf32>
    %163 = vector.shape_cast %160 : vector<8x256xf32> to vector<1x8x256xf32>
    tpu.vector_store %arg8[%c0_61, %c0_62, %c0_63], %163 {strides = array<i32>} : memref<1x8x256xf32, #tpu.memory_space<vmem>>, vector<1x8x256xf32>,
    %164 = vector.extract_strided_slice %136 {offsets = [8, 0], sizes = [24, 256], strides = [1, 1]} : vector<32x256xf32> to vector<24x256xf32>
    %c0_64 = arith.constant 0 : index
    %c0_65 = arith.constant 0 : index
    %165 = vector.load %arg6[%c0_64, %c0_65] : memref<24x256xf32, #tpu.memory_space<vmem>>, vector<24x256xf32>
    %c0_66 = arith.constant 0 : index
    %c0_67 = arith.constant 0 : index
    %166 = vector.load %arg7[%c0_66, %c0_67] : memref<24x256xf32, #tpu.memory_space<vmem>>, vector<24x256xf32>
    %167 = vector.shape_cast %164 : vector<24x256xf32> to vector<1x24x256xf32>
    %cst_68 = arith.constant dense<0.000000e+00> : vector<1xf32>
    %168 = vector.multi_reduction <add>, %167, %cst_68 [1, 2] : vector<1x24x256xf32> to vector<1xf32>
    %169 = vector.shape_cast %168 : vector<1xf32> to vector<1x1x1xf32>
    %170 = vector.extract %169[0, 0, 0] : f32 from vector<1x1x1xf32>
    %171 = arith.mulf %164, %164 : vector<24x256xf32>
    %172 = vector.shape_cast %171 : vector<24x256xf32> to vector<1x24x256xf32>
    %cst_69 = arith.constant dense<0.000000e+00> : vector<1xf32>
    %173 = vector.multi_reduction <add>, %172, %cst_69 [1, 2] : vector<1x24x256xf32> to vector<1xf32>
    %174 = vector.shape_cast %173 : vector<1xf32> to vector<1x1x1xf32>
    %175 = vector.extract %174[0, 0, 0] : f32 from vector<1x1x1xf32>
    %cst_70 = arith.constant 6.144000e+03 : f32
    %176 = arith.divf %170, %cst_70 : f32
    %cst_71 = arith.constant 6.144000e+03 : f32
    %177 = arith.divf %175, %cst_71 : f32
    %178 = arith.mulf %176, %176 : f32
    %179 = arith.subf %177, %178 : f32
    %180 = vector.broadcast %176 : f32 to vector<24x256xf32>
    %181 = arith.subf %164, %180 : vector<24x256xf32>
    %cst_72 = arith.constant 9.99999974E-6 : f32
    %182 = arith.addf %179, %cst_72 : f32
    %183 = math.rsqrt %182 : f32
    %184 = vector.broadcast %183 : f32 to vector<24x256xf32>
    %185 = arith.mulf %181, %184 : vector<24x256xf32>
    %186 = arith.mulf %185, %165 : vector<24x256xf32>
    %187 = arith.addf %186, %166 : vector<24x256xf32>
    %c0_73 = arith.constant 0 : index
    %c0_74 = arith.constant 0 : index
    %c0_75 = arith.constant 0 : index
    %188 = vector.load %arg9[%c0_73, %c0_74, %c0_75] : memref<1x24x256xf32, #tpu.memory_space<vmem>>, vector<1x24x256xf32>
    %189 = vector.shape_cast %188 : vector<1x24x256xf32> to vector<24x256xf32>
    %190 = vector.shape_cast %187 : vector<24x256xf32> to vector<1x24x256xf32>
    tpu.vector_store %arg9[%c0_73, %c0_74, %c0_75], %190 {strides = array<i32>} : memref<1x24x256xf32, #tpu.memory_space<vmem>>, vector<1x24x256xf32>,
    return
  }
  func.func @transform_0(%arg0: i32) -> (i32, i32, i32) {
    %c0_i32 = arith.constant 0 : i32
    %c0_i32_0 = arith.constant 0 : i32
    %c0_i32_1 = arith.constant 0 : i32
    return %arg0, %c0_i32, %c0_i32_0 : i32, i32, i32
  }
  func.func @transform_1(%arg0: i32) -> (i32, i32) {
    %c0_i32 = arith.constant 0 : i32
    %c0_i32_0 = arith.constant 0 : i32
    %c0_i32_1 = arith.constant 0 : i32
    return %c0_i32, %c0_i32_0 : i32, i32
  }
  func.func @transform_2(%arg0: i32) -> (i32, i32) {
    %c0_i32 = arith.constant 0 : i32
    %c0_i32_0 = arith.constant 0 : i32
    %c0_i32_1 = arith.constant 0 : i32
    return %c0_i32, %c0_i32_0 : i32, i32
  }
  func.func @transform_3(%arg0: i32) -> (i32, i32) {
    %c0_i32 = arith.constant 0 : i32
    %c0_i32_0 = arith.constant 0 : i32
    %c0_i32_1 = arith.constant 0 : i32
    return %c0_i32, %c0_i32_0 : i32, i32
  }
  func.func @transform_4(%arg0: i32) -> (i32, i32) {
    %c0_i32 = arith.constant 0 : i32
    %c0_i32_0 = arith.constant 0 : i32
    %c0_i32_1 = arith.constant 0 : i32
    return %c0_i32, %c0_i32_0 : i32, i32
  }
  func.func @transform_5(%arg0: i32) -> (i32, i32) {
    %c0_i32 = arith.constant 0 : i32
    %c0_i32_0 = arith.constant 0 : i32
    %c0_i32_1 = arith.constant 0 : i32
    return %c0_i32, %c0_i32_0 : i32, i32
  }
  func.func @transform_6(%arg0: i32) -> (i32, i32) {
    %c0_i32 = arith.constant 0 : i32
    %c0_i32_0 = arith.constant 0 : i32
    %c0_i32_1 = arith.constant 0 : i32
    return %c0_i32, %c0_i32_0 : i32, i32
  }
  func.func @transform_7(%arg0: i32) -> (i32, i32, i32) {
    %c0_i32 = arith.constant 0 : i32
    %c0_i32_0 = arith.constant 0 : i32
    %c0_i32_1 = arith.constant 0 : i32
    return %arg0, %c0_i32, %c0_i32_0 : i32, i32, i32
  }
  func.func @transform_8(%arg0: i32) -> (i32, i32, i32) {
    %c0_i32 = arith.constant 0 : i32
    %c0_i32_0 = arith.constant 0 : i32
    %c0_i32_1 = arith.constant 0 : i32
    return %arg0, %c0_i32, %c0_i32_0 : i32, i32, i32
  }
}

</mosaic_0001>

<llo_original>
// kernel: tpu_custom_call.1
$region0: #{tpu_custom_call.1}
  #allocation0 [shape = 'u32[]', space=smem, size = 0x4, offset = 0x4, fixed_abs, tag = 'smem constant byte address 0x4 - core index']
  #allocation1 [shape = 'u32[144,128]{1,0:T(1,128)}', space=vmem, size = 0x12000, scoped, tag = 'internal scratch']
  %s0 = inlined_call_operand.hbm [shape: f32[2,8,256], index: 0, kind: input, shape index: {}]
  %s1 = inlined_call_operand.hbm [shape: bf16[32,72], index: 1, kind: input, shape index: {}]
  %s2 = inlined_call_operand.vmem [shape: f32[32,1], index: 2, kind: input, shape index: {}]
  %s3 = inlined_call_operand.hbm [shape: f32[8,256], index: 3, kind: input, shape index: {}]
  %s4 = inlined_call_operand.hbm [shape: f32[8,256], index: 4, kind: input, shape index: {}]
  %s5 = inlined_call_operand.vmem [shape: f32[24,256], index: 5, kind: input, shape index: {}]
  %s6 = inlined_call_operand.hbm [shape: f32[24,256], index: 6, kind: input, shape index: {}]
  %s7 = inlined_call_operand.hbm [shape: f32[2,8,256], index: 7, kind: output, shape index: {0}]
  %s8 = inlined_call_operand.hbm [shape: f32[2,24,256], index: 8, kind: output, shape index: {1}]
  %9 = xla_tuple %s7, %s8
  %s10 = sld [smem:[#allocation0]]
  $region89: #{tpu_custom_call.1} parent=0
    _
  %s12 = ssub.s32 1, %s10
  %s13 = scalar_select 0, %s12, %s10
  $region1: #{tpu_custom_call.1} parent=0
    #allocation2 [shape = 'u8[16384]{0}', space=vmem, size = 0x4000, scoped, tag = 'input window, operand 0']
    #allocation3 [shape = 's32[2]{0}', space=sflag, size = 0x8, scoped, tag = 'scoped memory for tpu_custom_call.1']
    #allocation4 [shape = 's32[2]{0}', space=sflag, size = 0x8, scoped, tag = 'scoped memory for tpu_custom_call.1']
    #allocation5 [shape = 'u8[8192]{0}', space=vmem, size = 0x2000, scoped, tag = 'input window, operand 1, single buffered']
    #allocation6 [shape = 's32[1]{0}', space=sflag, size = 0x4, scoped, tag = 'scoped memory for tpu_custom_call.1']
    #allocation7 [shape = 'u8[8192]{0}', space=vmem, size = 0x2000, scoped, tag = 'input window, operand 3, single buffered']
    #allocation8 [shape = 'u8[8192]{0}', space=vmem, size = 0x2000, scoped, tag = 'input window, operand 4, single buffered']
    #allocation9 [shape = 's32[1]{0}', space=sflag, size = 0x4, scoped, tag = 'scoped memory for tpu_custom_call.1']
    #allocation10 [shape = 'u8[24576]{0}', space=vmem, size = 0x6000, scoped, tag = 'input window, operand 6, single buffered']
    #allocation11 [shape = 'u8[16384]{0}', space=vmem, size = 0x4000, scoped, tag = 'output window, operand 0']
    #allocation12 [shape = 'u8[49152]{0}', space=vmem, size = 0xc000, scoped, tag = 'output window, operand 1']
    #allocation13 [shape = 's32[2]{0}', space=sflag, size = 0x8, scoped, tag = 'scoped memory for tpu_custom_call.1']
    %14 = vsyncpa [#allocation3], 0
    %s15 = scalar_lea.sflag [#allocation3], 1
    %16 = vsyncpa %s15, 0
    %17 = vsyncpa [#allocation6], 0
    %18 = vsyncpa [#allocation9], 0
    %19 = vsyncpa [#allocation4], 0
    %s20 = scalar_lea.sflag [#allocation4], 1
    %21 = vsyncpa %s20, 0
    %22 = vsyncpa [#allocation13], 0
    %s23 = scalar_lea.sflag [#allocation13], 1
    %24 = vsyncpa %s23, 0
    loop: start=0, step=1, limit=4
    $region2: #{tpu_custom_call.1} parent=1 // loop_pre_header
      _
    $region3: #{tpu_custom_call.1} parent=1 // loop_header
      %s26 = sphi 0, %s30
      %p27 = scmp.ge.s32.totalorder %s26, 4
      %s36 = sphi 0, %s38
      %s39 = sphi 0, %s36
      %s40 = sphi 0, %s39
      %s56 = sphi 0, %s40
      %s60 = sphi 0, %s60
      %s62 = sphi 0, %s60
      %s63 = sphi 0, %s62
      %s77 = sphi 0, %s63
      %s81 = sphi 0, %s81
      %s83 = sphi 0, %s81
      %s84 = sphi 0, %s83
      %s98 = sphi 0, %s84
      %s102 = sphi 0, %s102
      %s104 = sphi 0, %s102
      %s105 = sphi 0, %s104
      %s119 = sphi 0, %s105
      %s123 = sphi 0, %s123
      %s125 = sphi 0, %s123
      %s126 = sphi 0, %s125
      %s140 = sphi 0, %s126
      %s144 = sphi 0, %s144
      %s146 = sphi 0, %s144
      %s147 = sphi 0, %s146
      %s161 = sphi 0, %s147
      %s165 = sphi 0, %s165
      %s167 = sphi 0, %s165
      %s168 = sphi 0, %s167
      %s182 = sphi 0, %s168
      %s188 = sphi 0, %s190
      %s191 = sphi 0, %s188
      %s192 = sphi 0, %s191
      %s208 = sphi 0, %s192
      %s214 = sphi 0, %s216
      %s217 = sphi 0, %s214
      %s218 = sphi 0, %s217
      %s234 = sphi 0, %s218
    $region4: #{tpu_custom_call.1} parent=1 // loop_header_branch
      %29 = sbr.rel (%p27) target = $region8
    $region5: #{tpu_custom_call.1} parent=1 // loop_body
      %s31 = ssub.s32 %s26, 1
      %s32 = ssub.s32 %s26, 2
      %s33 = sadd.s32 %s26, 1
      %s34 = ssub.s32 %s26, %s33
      %p35 = scmp.eq.s32.totalorder %s34, 0
      %s37 = sadd.s32 %s36, 1
      %s38 = scalar_select %p35, %s36, %s37
      %p41 = pneg %p35
      %p42 = scmp.eq.s32.totalorder %s26, 1
      %p43 = por %p41, %p42
      %p44 = scmp.ne.s32.totalorder %s36, %s39
      %p45 = scmp.eq.s32.totalorder %s26, 0
      %p46 = por %p44, %p45
      %p47 = scmp.ne.s32.totalorder %s36, %s39
      %p48 = scmp.eq.s32.totalorder %s31, 1
      %p49 = por %p47, %p48
      %p50 = scmp.ne.s32.totalorder %s39, %s40
      %p51 = scmp.eq.s32.totalorder %s31, 0
      %p52 = por %p50, %p51
      %p53 = scmp.ne.s32.totalorder %s39, %s40
      %p54 = scmp.eq.s32.totalorder %s32, 1
      %p55 = por %p53, %p54
      %p57 = scmp.ne.s32.totalorder %s40, %s56
      %p58 = scmp.eq.s32.totalorder %s32, 0
      %p59 = por %p57, %p58
      %s61 = sadd.s32 %s60, 1
      %p64 = scmp.eq.s32.totalorder %s26, 1
      %p65 = scmp.ne.s32.totalorder %s60, %s62
      %p66 = scmp.eq.s32.totalorder %s26, 0
      %p67 = por %p65, %p66
      %p68 = scmp.ne.s32.totalorder %s60, %s62
      %p69 = scmp.eq.s32.totalorder %s31, 1
      %p70 = por %p68, %p69
      %p71 = scmp.ne.s32.totalorder %s62, %s63
      %p72 = scmp.eq.s32.totalorder %s31, 0
      %p73 = por %p71, %p72
      %p74 = scmp.ne.s32.totalorder %s62, %s63
      %p75 = scmp.eq.s32.totalorder %s32, 1
      %p76 = por %p74, %p75
      %p78 = scmp.ne.s32.totalorder %s63, %s77
      %p79 = scmp.eq.s32.totalorder %s32, 0
      %p80 = por %p78, %p79
      %s82 = sadd.s32 %s81, 1
      %p85 = scmp.eq.s32.totalorder %s26, 1
      %p86 = scmp.ne.s32.totalorder %s81, %s83
      %p87 = scmp.eq.s32.totalorder %s26, 0
      %p88 = por %p86, %p87
      %p89 = scmp.ne.s32.totalorder %s81, %s83
      %p90 = scmp.eq.s32.totalorder %s31, 1
      %p91 = por %p89, %p90
      %p92 = scmp.ne.s32.totalorder %s83, %s84
      %p93 = scmp.eq.s32.totalorder %s31, 0
      %p94 = por %p92, %p93
      %p95 = scmp.ne.s32.totalorder %s83, %s84
      %p96 = scmp.eq.s32.totalorder %s32, 1
      %p97 = por %p95, %p96
      %p99 = scmp.ne.s32.totalorder %s84, %s98
      %p100 = scmp.eq.s32.totalorder %s32, 0
      %p101 = por %p99, %p100
      %s103 = sadd.s32 %s102, 1
      %p106 = scmp.eq.s32.totalorder %s26, 1
      %p107 = scmp.ne.s32.totalorder %s102, %s104
      %p108 = scmp.eq.s32.totalorder %s26, 0
      %p109 = por %p107, %p108
      %p110 = scmp.ne.s32.totalorder %s102, %s104
      %p111 = scmp.eq.s32.totalorder %s31, 1
      %p112 = por %p110, %p111
      %p113 = scmp.ne.s32.totalorder %s104, %s105
      %p114 = scmp.eq.s32.totalorder %s31, 0
      %p115 = por %p113, %p114
      %p116 = scmp.ne.s32.totalorder %s104, %s105
      %p117 = scmp.eq.s32.totalorder %s32, 1
      %p118 = por %p116, %p117
      %p120 = scmp.ne.s32.totalorder %s105, %s119
      %p121 = scmp.eq.s32.totalorder %s32, 0
      %p122 = por %p120, %p121
      %s124 = sadd.s32 %s123, 1
      %p127 = scmp.eq.s32.totalorder %s26, 1
      %p128 = scmp.ne.s32.totalorder %s123, %s125
      %p129 = scmp.eq.s32.totalorder %s26, 0
      %p130 = por %p128, %p129
      %p131 = scmp.ne.s32.totalorder %s123, %s125
      %p132 = scmp.eq.s32.totalorder %s31, 1
      %p133 = por %p131, %p132
      %p134 = scmp.ne.s32.totalorder %s125, %s126
      %p135 = scmp.eq.s32.totalorder %s31, 0
      %p136 = por %p134, %p135
      %p137 = scmp.ne.s32.totalorder %s125, %s126
      %p138 = scmp.eq.s32.totalorder %s32, 1
      %p139 = por %p137, %p138
      %p141 = scmp.ne.s32.totalorder %s126, %s140
      %p142 = scmp.eq.s32.totalorder %s32, 0
      %p143 = por %p141, %p142
      %s145 = sadd.s32 %s144, 1
      %p148 = scmp.eq.s32.totalorder %s26, 1
      %p149 = scmp.ne.s32.totalorder %s144, %s146
      %p150 = scmp.eq.s32.totalorder %s26, 0
      %p151 = por %p149, %p150
      %p152 = scmp.ne.s32.totalorder %s144, %s146
      %p153 = scmp.eq.s32.totalorder %s31, 1
      %p154 = por %p152, %p153
      %p155 = scmp.ne.s32.totalorder %s146, %s147
      %p156 = scmp.eq.s32.totalorder %s31, 0
      %p157 = por %p155, %p156
      %p158 = scmp.ne.s32.totalorder %s146, %s147
      %p159 = scmp.eq.s32.totalorder %s32, 1
      %p160 = por %p158, %p159
      %p162 = scmp.ne.s32.totalorder %s147, %s161
      %p163 = scmp.eq.s32.totalorder %s32, 0
      %p164 = por %p162, %p163
      %s166 = sadd.s32 %s165, 1
      %p169 = scmp.eq.s32.totalorder %s26, 1
      %p170 = scmp.ne.s32.totalorder %s165, %s167
      %p171 = scmp.eq.s32.totalorder %s26, 0
      %p172 = por %p170, %p171
      %p173 = scmp.ne.s32.totalorder %s165, %s167
      %p174 = scmp.eq.s32.totalorder %s31, 1
      %p175 = por %p173, %p174
      %p176 = scmp.ne.s32.totalorder %s167, %s168
      %p177 = scmp.eq.s32.totalorder %s31, 0
      %p178 = por %p176, %p177
      %p179 = scmp.ne.s32.totalorder %s167, %s168
      %p180 = scmp.eq.s32.totalorder %s32, 1
      %p181 = por %p179, %p180
      %p183 = scmp.ne.s32.totalorder %s168, %s182
      %p184 = scmp.eq.s32.totalorder %s32, 0
      %p185 = por %p183, %p184
      %s186 = ssub.s32 %s26, %s33
      %p187 = scmp.eq.s32.totalorder %s186, 0
      %s189 = sadd.s32 %s188, 1
      %s190 = scalar_select %p187, %s188, %s189
      %p193 = pneg %p187
      %p194 = scmp.eq.s32.totalorder %s26, 1
      %p195 = por %p193, %p194
      %p196 = scmp.ne.s32.totalorder %s188, %s191
      %p197 = scmp.eq.s32.totalorder %s26, 0
      %p198 = por %p196, %p197
      %p199 = scmp.ne.s32.totalorder %s188, %s191
      %p200 = scmp.eq.s32.totalorder %s31, 1
      %p201 = por %p199, %p200
      %p202 = scmp.ne.s32.totalorder %s191, %s192
      %p203 = scmp.eq.s32.totalorder %s31, 0
      %p204 = por %p202, %p203
      %p205 = scmp.ne.s32.totalorder %s191, %s192
      %p206 = scmp.eq.s32.totalorder %s32, 1
      %p207 = por %p205, %p206
      %p209 = scmp.ne.s32.totalorder %s192, %s208
      %p210 = scmp.eq.s32.totalorder %s32, 0
      %p211 = por %p209, %p210
      %s212 = ssub.s32 %s26, %s33
      %p213 = scmp.eq.s32.totalorder %s212, 0
      %s215 = sadd.s32 %s214, 1
      %s216 = scalar_select %p213, %s214, %s215
      %p219 = pneg %p213
      %p220 = scmp.eq.s32.totalorder %s26, 1
      %p221 = por %p219, %p220
      %p222 = scmp.ne.s32.totalorder %s214, %s217
      %p223 = scmp.eq.s32.totalorder %s26, 0
      %p224 = por %p222, %p223
      %p225 = scmp.ne.s32.totalorder %s214, %s217
      %p226 = scmp.eq.s32.totalorder %s31, 1
      %p227 = por %p225, %p226
      %p228 = scmp.ne.s32.totalorder %s217, %s218
      %p229 = scmp.eq.s32.totalorder %s31, 0
      %p230 = por %p228, %p229
      %p231 = scmp.ne.s32.totalorder %s217, %s218
      %p232 = scmp.eq.s32.totalorder %s32, 1
      %p233 = por %p231, %p232
      %p235 = scmp.ne.s32.totalorder %s218, %s234
      %p236 = scmp.eq.s32.totalorder %s32, 0
      %p237 = por %p235, %p236
      %p238 = scmp.le.s32.totalorder 1, %s26
      %p239 = scmp.lt.s32.totalorder %s26, 3
      %p240 = pnand %p238, %p239
      %p241 = pneg %p240
      // Predicated region
      $region9: #{tpu_custom_call.1} parent=5 // pred_check
        _
      $region10: #{tpu_custom_call.1} parent=5 // pred_check_branch
        %243 = sbr.rel (%p240) target = $region12
      $region11: #{tpu_custom_call.1} parent=5 // pred_region
        %s244 = ssub.s32 %s26, 1
        // Predicated region
        $region13: #{tpu_custom_call.1} parent=11 // pred_check
          %p245 = pneg %p73
        $region14: #{tpu_custom_call.1} parent=11 // pred_check_branch
          %247 = sbr.rel (%p245) target = $region16
        $region15: #{tpu_custom_call.1} parent=11 // pred_region
          %s249 = ssub.s32 256, 256
          %250 = vsyncadd [#allocation6], %s249
          %s251 = sshll.u32 [#allocation5], 4
          %s252 = int_to_ptr.vmem [resolvable:$true] %s251
          %257 = dma.hbm_to_vmem [thread:$0]  %s1, 256, %s252, [#allocation6], 64, 64, 4
        $region16: #{tpu_custom_call.1} parent=11 // pred_fallthru
          _
        // Predicated region
        $region17: #{tpu_custom_call.1} parent=11 // pred_check
          %p258 = pneg %p94
        $region18: #{tpu_custom_call.1} parent=11 // pred_check_branch
          %260 = sbr.rel (%p258) target = $region20
        $region19: #{tpu_custom_call.1} parent=11 // pred_region
          _
        $region20: #{tpu_custom_call.1} parent=11 // pred_fallthru
          _
        // Predicated region
        $region21: #{tpu_custom_call.1} parent=11 // pred_check
          %p261 = pneg %p115
        $region22: #{tpu_custom_call.1} parent=11 // pred_check_branch
          %263 = sbr.rel (%p261) target = $region24
        $region23: #{tpu_custom_call.1} parent=11 // pred_region
          %s265 = ssub.s32 256, 256
          %266 = vsyncadd [#allocation6], %s265
          %s268 = sshll.u32 [#allocation7], 4
          %s269 = int_to_ptr.vmem [resolvable:$true] %s268
          %271 = dma.hbm_to_vmem [thread:$0]  %s3, 256, %s269, [#allocation6]
        $region24: #{tpu_custom_call.1} parent=11 // pred_fallthru
          _
        // Predicated region
        $region25: #{tpu_custom_call.1} parent=11 // pred_check
          %p272 = pneg %p136
        $region26: #{tpu_custom_call.1} parent=11 // pred_check_branch
          %274 = sbr.rel (%p272) target = $region28
        $region27: #{tpu_custom_call.1} parent=11 // pred_region
          %s276 = ssub.s32 256, 256
          %277 = vsyncadd [#allocation9], %s276
          %s279 = sshll.u32 [#allocation8], 4
          %s280 = int_to_ptr.vmem [resolvable:$true] %s279
          %282 = dma.hbm_to_vmem [thread:$0]  %s4, 256, %s280, [#allocation9]
        $region28: #{tpu_custom_call.1} parent=11 // pred_fallthru
          _
        // Predicated region
        $region29: #{tpu_custom_call.1} parent=11 // pred_check
          %p283 = pneg %p157
        $region30: #{tpu_custom_call.1} parent=11 // pred_check_branch
          %285 = sbr.rel (%p283) target = $region32
        $region31: #{tpu_custom_call.1} parent=11 // pred_region
          _
        $region32: #{tpu_custom_call.1} parent=11 // pred_fallthru
          _
        // Predicated region
        $region33: #{tpu_custom_call.1} parent=11 // pred_check
          %p286 = pneg %p178
        $region34: #{tpu_custom_call.1} parent=11 // pred_check_branch
          %288 = sbr.rel (%p286) target = $region36
        $region35: #{tpu_custom_call.1} parent=11 // pred_region
          %s290 = ssub.s32 768, 768
          %291 = vsyncadd [#allocation9], %s290
          %s292 = sshll.u32 [#allocation10], 4
          %s293 = int_to_ptr.vmem [resolvable:$true] %s292
          %298 = dma.hbm_to_vmem [thread:$0]  %s6, 768, %s293, [#allocation9], 256, 256, 16
        $region36: #{tpu_custom_call.1} parent=11 // pred_fallthru
          _
      $region12: #{tpu_custom_call.1} parent=5 // pred_fallthru
        _
      %p299 = scmp.lt.s32.totalorder %s26, 2
      // Predicated region
      $region37: #{tpu_custom_call.1} parent=5 // pred_check
        %p300 = pneg %p299
      $region38: #{tpu_custom_call.1} parent=5 // pred_check_branch
        %302 = sbr.rel (%p300) target = $region40
      $region39: #{tpu_custom_call.1} parent=5 // pred_region
        // Predicated region
        $region41: #{tpu_custom_call.1} parent=39 // pred_check
          %p303 = pneg %p46
        $region42: #{tpu_custom_call.1} parent=39 // pred_check_branch
          %305 = sbr.rel (%p303) target = $region44
        $region43: #{tpu_custom_call.1} parent=39 // pred_region
          %s306 = sand.u32 %s36, 1
          %s307 = scalar_lea.sflag [#allocation3], %s306
          %s308 = sand.u32 %s36, 1
          %s309 = smul.addr %s308, 16
          %s310 = scalar_lea.vmem [#allocation2], %s309
          %s312 = ssub.s32 256, 256
          %313 = vsyncadd %s307, %s312
          %s314 = smul.addr %s26, 2
          %s315 = smul.addr %s314, 128
          %s316 = scalar_lea.hbm %s0, %s315
          %s318 = sshll.u32 %s310, 4
          %s319 = int_to_ptr.vmem [resolvable:$true] %s318
          %321 = dma.hbm_to_vmem [thread:$0]  %s316, 256, %s319, %s307
        $region44: #{tpu_custom_call.1} parent=39 // pred_fallthru
          _
      $region40: #{tpu_custom_call.1} parent=5 // pred_fallthru
        _
      %p322 = scmp.le.s32.totalorder 1, %s26
      %p323 = scmp.lt.s32.totalorder %s26, 3
      %p324 = pnand %p322, %p323
      %p325 = pneg %p324
      // Predicated region
      $region45: #{tpu_custom_call.1} parent=5 // pred_check
        _
      $region46: #{tpu_custom_call.1} parent=5 // pred_check_branch
        %327 = sbr.rel (%p324) target = $region48
      $region47: #{tpu_custom_call.1} parent=5 // pred_region
        %s328 = ssub.s32 %s26, 1
        %s329 = sand.u32 %s39, 1
        %s330 = scalar_lea.sflag [#allocation3], %s329
        %s331 = sand.u32 %s39, 1
        %s332 = smul.addr %s331, 16
        %s333 = scalar_lea.vmem [#allocation2], %s332
        // Predicated region
        $region49: #{tpu_custom_call.1} parent=47 // pred_check
          %p334 = pneg %p52
        $region50: #{tpu_custom_call.1} parent=47 // pred_check_branch
          %336 = sbr.rel (%p334) target = $region52
        $region51: #{tpu_custom_call.1} parent=47 // pred_region
          %337 = dma.done %s330, 256
        $region52: #{tpu_custom_call.1} parent=47 // pred_fallthru
          _
        // Predicated region
        $region53: #{tpu_custom_call.1} parent=47 // pred_check
          %p338 = pneg %p73
        $region54: #{tpu_custom_call.1} parent=47 // pred_check_branch
          %340 = sbr.rel (%p338) target = $region56
        $region55: #{tpu_custom_call.1} parent=47 // pred_region
          %341 = dma.done [#allocation6], 256
        $region56: #{tpu_custom_call.1} parent=47 // pred_fallthru
          _
        // Predicated region
        $region57: #{tpu_custom_call.1} parent=47 // pred_check
          %p342 = pneg %p115
        $region58: #{tpu_custom_call.1} parent=47 // pred_check_branch
          %344 = sbr.rel (%p342) target = $region60
        $region59: #{tpu_custom_call.1} parent=47 // pred_region
          %345 = dma.done [#allocation6], 256
        $region60: #{tpu_custom_call.1} parent=47 // pred_fallthru
          _
        // Predicated region
        $region61: #{tpu_custom_call.1} parent=47 // pred_check
          %p346 = pneg %p136
        $region62: #{tpu_custom_call.1} parent=47 // pred_check_branch
          %348 = sbr.rel (%p346) target = $region64
        $region63: #{tpu_custom_call.1} parent=47 // pred_region
          %349 = dma.done [#allocation9], 256
        $region64: #{tpu_custom_call.1} parent=47 // pred_fallthru
          _
        // Predicated region
        $region65: #{tpu_custom_call.1} parent=47 // pred_check
          %p350 = pneg %p178
        $region66: #{tpu_custom_call.1} parent=47 // pred_check_branch
          %352 = sbr.rel (%p350) target = $region68
        $region67: #{tpu_custom_call.1} parent=47 // pred_region
          %353 = dma.done [#allocation9], 768
        $region68: #{tpu_custom_call.1} parent=47 // pred_fallthru
          _
        %s354 = sand.u32 %s39, 1
        %s355 = scalar_lea.sflag [#allocation3], %s354
        %s356 = sand.u32 %s39, 1
        %s357 = smul.addr %s356, 16
        %s358 = scalar_lea.vmem [#allocation2], %s357
        %p359 = pneg %p52
        %p360 = pneg %p49
        %p361 = pneg %p73
        %p362 = pneg %p70
        %p363 = pneg %p94
        %p364 = pneg %p91
        %p365 = pneg %p115
        %p366 = pneg %p112
        %p367 = pneg %p136
        %p368 = pneg %p133
        %p369 = pneg %p157
        %p370 = pneg %p154
        %p371 = pneg %p178
        %p372 = pneg %p175
        %p373 = pneg %p204
        %p374 = pneg %p201
        %s375 = sand.u32 %s191, 1
        %s376 = scalar_lea.sflag [#allocation4], %s375
        %s377 = sand.u32 %s191, 1
        %s378 = smul.addr %s377, 16
        %s379 = scalar_lea.vmem [#allocation11], %s378
        %p380 = pneg %p230
        %p381 = pneg %p227
        %s382 = sand.u32 %s217, 1
        %s383 = scalar_lea.sflag [#allocation13], %s382
        %s384 = sand.u32 %s217, 1
        %s385 = smul.addr %s384, 48
        %s386 = scalar_lea.vmem [#allocation12], %s385
        %v388 = vld [vmem:[%s333] sm:$0xff]
        %v389 = vld [vmem:[%s333 + $0x8] sm:$0xff]
        %v390 = vld [vmem:[#allocation5] sm:$0xf]
        %v391 = vld [vmem:[#allocation5 + $0x4] sm:$0xf]
        %v392 = vld [vmem:[#allocation5 + $0x8] sm:$0xf]
        %v393 = vld [vmem:[#allocation5 + $0xc] sm:$0xf]
        %v394 = vld [vmem:[%s2] sm:$0xff]
        %v395 = vld [vmem:[%s2 + $0x8] sm:$0xff]
        %v396 = vld [vmem:[%s2 + $0x10] sm:$0xff]
        %v397 = vld [vmem:[%s2 + $0x18] sm:$0xff]
        %v398 = vlaneseq
        %v399 = vand.u32 %v398, 127
        %v400 = vadd.s32 %v399, 128
        %v401 = vand.u32 %v399, 15
        %v402 = vand.u32 %v400, 15
        %403 = vrot.lane.b32.xlu0 %v388, 17
        %v404 = vpop.permute.xlu0 %403
        %405 = vrot.lane.b32.xlu0 %v389, 17
        %v406 = vpop.permute.xlu0 %405
        %vm407 = vcmp.lt.s32.totalorder %v399, 17
        %v408 = vsel %vm407, %v404, %v406
        %v409 = vsel %vm407, %v406, %v404
        %v410 = vadd.s32 %v399, 4294967279
        %v411 = vadd.s32 %v400, 4294967279
        %vm412 = vcmp.ge.s32.totalorder %v410, 0
        %vm413 = vcmp.ge.s32.totalorder %v411, 0
        %vm414 = vcmp.lt.s32.totalorder %v410, 256
        %vm415 = vcmp.lt.s32.totalorder %v411, 256
        %vm416 = vmand %vm412, %vm414
        %vm417 = vmand %vm413, %vm415
        %vm418 = vcmp.ge.s32.totalorder %v401, 1
        %vm419 = vcmp.ge.s32.totalorder %v402, 1
        %vm420 = vmand %vm416, %vm418
        %vm421 = vmand %vm417, %vm419
        %v422 = vsel %vm420, %v409, 0.0
        %v423 = vsel %vm421, %v408, 0.0
        %424 = vrot.lane.b32.xlu0 %v388, 16
        %v425 = vpop.permute.xlu0 %424
        %426 = vrot.lane.b32.xlu0 %v389, 16
        %v427 = vpop.permute.xlu0 %426
        %vm428 = vcmp.lt.s32.totalorder %v399, 16
        %v429 = vsel %vm428, %v425, %v427
        %v430 = vsel %vm428, %v427, %v425
        %v431 = vadd.s32 %v399, 4294967280
        %v432 = vadd.s32 %v400, 4294967280
        %vm433 = vcmp.ge.s32.totalorder %v431, 0
        %vm434 = vcmp.ge.s32.totalorder %v432, 0
        %vm435 = vcmp.lt.s32.totalorder %v431, 256
        %vm436 = vcmp.lt.s32.totalorder %v432, 256
        %vm437 = vmand %vm433, %vm435
        %vm438 = vmand %vm434, %vm436
        %v439 = vsel %vm437, %v430, 0.0
        %v440 = vsel %vm438, %v429, 0.0
        %441 = vrot.lane.b32.xlu0 %v388, 15
        %v442 = vpop.permute.xlu0 %441
        %443 = vrot.lane.b32.xlu0 %v389, 15
        %v444 = vpop.permute.xlu0 %443
        %vm445 = vcmp.lt.s32.totalorder %v399, 15
        %v446 = vsel %vm445, %v442, %v444
        %v447 = vsel %vm445, %v444, %v442
        %v448 = vadd.s32 %v399, 4294967281
        %v449 = vadd.s32 %v400, 4294967281
        %vm450 = vcmp.ge.s32.totalorder %v448, 0
        %vm451 = vcmp.ge.s32.totalorder %v449, 0
        %vm452 = vcmp.lt.s32.totalorder %v448, 256
        %vm453 = vcmp.lt.s32.totalorder %v449, 256
        %vm454 = vmand %vm450, %vm452
        %vm455 = vmand %vm451, %vm453
        %vm456 = vcmp.lt.s32.totalorder %v401, 15
        %vm457 = vcmp.lt.s32.totalorder %v402, 15
        %vm458 = vmand %vm454, %vm456
        %vm459 = vmand %vm455, %vm457
        %v460 = vsel %vm458, %v447, 0.0
        %v461 = vsel %vm459, %v446, 0.0
        %462 = vrot.lane.b32.xlu0 %v388, 1
        %v463 = vpop.permute.xlu0 %462
        %464 = vrot.lane.b32.xlu0 %v389, 1
        %v465 = vpop.permute.xlu0 %464
        %vm466 = vcmp.lt.s32.totalorder %v399, 1
        %v467 = vsel %vm466, %v463, %v465
        %v468 = vsel %vm466, %v465, %v463
        %v469 = vadd.s32 %v399, 4294967295
        %v470 = vadd.s32 %v400, 4294967295
        %vm471 = vcmp.ge.s32.totalorder %v469, 0
        %vm472 = vcmp.ge.s32.totalorder %v470, 0
        %vm473 = vcmp.lt.s32.totalorder %v469, 256
        %vm474 = vcmp.lt.s32.totalorder %v470, 256
        %vm475 = vmand %vm471, %vm473
        %vm476 = vmand %vm472, %vm474
        %vm477 = vmand %vm475, %vm418
        %vm478 = vmand %vm476, %vm419
        %v479 = vsel %vm477, %v468, 0.0
        %v480 = vsel %vm478, %v467, 0.0
        %vm481 = vcmp.ge.s32.totalorder %v399, 0
        %vm482 = vcmp.ge.s32.totalorder %v400, 0
        %vm483 = vcmp.lt.s32.totalorder %v399, 256
        %vm484 = vcmp.lt.s32.totalorder %v400, 256
        %vm485 = vmand %vm481, %vm483
        %vm486 = vmand %vm482, %vm484
        %v487 = vsel %vm485, %v388, 0.0
        %v488 = vsel %vm486, %v389, 0.0
        %489 = vrot.lane.b32.xlu0 %v388, 127
        %v490 = vpop.permute.xlu0 %489
        %491 = vrot.lane.b32.xlu0 %v389, 127
        %v492 = vpop.permute.xlu0 %491
        %vm493 = vcmp.lt.s32.totalorder %v399, 127
        %v494 = vsel %vm493, %v490, %v492
        %v495 = vsel %vm493, %v492, %v490
        %v496 = vadd.s32 %v399, 1
        %v497 = vadd.s32 %v400, 1
        %vm498 = vcmp.ge.s32.totalorder %v496, 0
        %vm499 = vcmp.ge.s32.totalorder %v497, 0
        %vm500 = vcmp.lt.s32.totalorder %v496, 256
        %vm501 = vcmp.lt.s32.totalorder %v497, 256
        %vm502 = vmand %vm498, %vm500
        %vm503 = vmand %vm499, %vm501
        %vm504 = vmand %vm502, %vm456
        %vm505 = vmand %vm503, %vm457
        %v506 = vsel %vm504, %v494, 0.0
        %v507 = vsel %vm505, %v495, 0.0
        %508 = vrot.lane.b32.xlu0 %v388, 113
        %v509 = vpop.permute.xlu0 %508
        %510 = vrot.lane.b32.xlu0 %v389, 113
        %v511 = vpop.permute.xlu0 %510
        %vm512 = vcmp.lt.s32.totalorder %v399, 113
        %v513 = vsel %vm512, %v509, %v511
        %v514 = vsel %vm512, %v511, %v509
        %v515 = vadd.s32 %v399, 15
        %v516 = vadd.s32 %v400, 15
        %vm517 = vcmp.ge.s32.totalorder %v515, 0
        %vm518 = vcmp.ge.s32.totalorder %v516, 0
        %vm519 = vcmp.lt.s32.totalorder %v515, 256
        %vm520 = vcmp.lt.s32.totalorder %v516, 256
        %vm521 = vmand %vm517, %vm519
        %vm522 = vmand %vm518, %vm520
        %vm523 = vmand %vm521, %vm418
        %vm524 = vmand %vm522, %vm419
        %v525 = vsel %vm523, %v513, 0.0
        %v526 = vsel %vm524, %v514, 0.0
        %527 = vrot.lane.b32.xlu0 %v388, 112
        %v528 = vpop.permute.xlu0 %527
        %529 = vrot.lane.b32.xlu0 %v389, 112
        %v530 = vpop.permute.xlu0 %529
        %vm531 = vcmp.lt.s32.totalorder %v399, 112
        %v532 = vsel %vm531, %v528, %v530
        %v533 = vsel %vm531, %v530, %v528
        %v534 = vadd.s32 %v399, 16
        %v535 = vadd.s32 %v400, 16
        %vm536 = vcmp.ge.s32.totalorder %v534, 0
        %vm537 = vcmp.ge.s32.totalorder %v535, 0
        %vm538 = vcmp.lt.s32.totalorder %v534, 256
        %vm539 = vcmp.lt.s32.totalorder %v535, 256
        %vm540 = vmand %vm536, %vm538
        %vm541 = vmand %vm537, %vm539
        %v542 = vsel %vm540, %v532, 0.0
        %v543 = vsel %vm541, %v533, 0.0
        %544 = vrot.lane.b32.xlu0 %v388, 111
        %v545 = vpop.permute.xlu0 %544
        %546 = vrot.lane.b32.xlu0 %v389, 111
        %v547 = vpop.permute.xlu0 %546
        %vm548 = vcmp.lt.s32.totalorder %v399, 111
        %v549 = vsel %vm548, %v545, %v547
        %v550 = vsel %vm548, %v547, %v545
        %v551 = vadd.s32 %v399, 17
        %v552 = vadd.s32 %v400, 17
        %vm553 = vcmp.ge.s32.totalorder %v551, 0
        %vm554 = vcmp.ge.s32.totalorder %v552, 0
        %vm555 = vcmp.lt.s32.totalorder %v551, 256
        %vm556 = vcmp.lt.s32.totalorder %v552, 256
        %vm557 = vmand %vm553, %vm555
        %vm558 = vmand %vm554, %vm556
        %vm559 = vmand %vm557, %vm456
        %vm560 = vmand %vm558, %vm457
        %v561 = vsel %vm559, %v549, 0.0
        %v562 = vsel %vm560, %v550, 0.0
        %v563 = vpack.c.bf16 %v439, %v422
        %v564 = vpack.c.bf16 %v440, %v423
        %v565 = vpack.c.bf16 %v479, %v460
        %v566 = vpack.c.bf16 %v480, %v461
        %v567 = vpack.c.bf16 %v506, %v487
        %v568 = vpack.c.bf16 %v507, %v488
        %v569 = vpack.c.bf16 %v542, %v525
        %v570 = vpack.c.bf16 %v543, %v526
        %v571 = vpack.c.bf16 %v561, %v561
        %v572 = vpack.c.bf16 %v562, %v562
        %574 = vset.pattern.permute.xlu0 0
        %575 = vperm.xlu0 %574, %v394
        %v576 = vpop.permute.xlu0 %575
        %579 = vset.pattern.permute.xlu0 0
        %580 = vperm.xlu0 %579, %v395
        %v581 = vpop.permute.xlu0 %580
        %584 = vset.pattern.permute.xlu0 0
        %585 = vperm.xlu0 %584, %v396
        %v586 = vpop.permute.xlu0 %585
        %589 = vset.pattern.permute.xlu0 0
        %590 = vperm.xlu0 %589, %v397
        %v591 = vpop.permute.xlu0 %590
        %v597 = vunpack.c.l.b16 %v390
        %v598 = vunpack.c.l.b16 %v391
        %v599 = vunpack.c.l.b16 %v392
        %v600 = vunpack.c.l.b16 %v393
        %v601 = vpack.c.b16 %v598, %v597
        %v602 = vpack.c.b16 %v600, %v599
        %vm603 = vcmask 588800
        %v605 = vsel %vm603, %v601, 0
        %v608 = vsel %vm603, %v602, 0
        %vm610 = vcmask 1043456
        %v612 = vsel %vm610, %v571, 0
        %v615 = vsel %vm610, %v572, 0
        %617 = vmatprep.subr.bf16.mxu0 %v564
        %618 = vmatpush1.bf16.msra.mxu0 %v563
        %619 = vmatprep.subr.bf16.mxu0 %v566
        %620 = vmatpush1.bf16.msra.mxu0 %v565
        %621 = vmatprep.subr.bf16.mxu0 %v568
        %622 = vmatpush1.bf16.msra.mxu0 %v567
        %623 = vmatprep.subr.bf16.mxu0 %v570
        %624 = vmatpush1.bf16.msra.mxu0 %v569
        %625 = vmatprep.subr.bf16.mxu0 %v615
        %626 = vmatpush1.bf16.msra.mxu0 %v612
        %627 = vmatprep.subr.bf16.mxu0 0
        %628 = vmatpush1.bf16.msra.mxu0 0
        %629 = vmatprep.subr.bf16.mxu0 0
        %630 = vmatpush1.bf16.msra.mxu0 0
        %631 = vmatprep.subr.bf16.mxu0 0
        %632 = vmatpush1.bf16.msra.mxu0 0
        %633 = vmatprep.subr.bf16.mxu0 0
        %634 = vmatpush1.bf16.msra.mxu0 0
        %635 = vmatprep.subr.bf16.mxu0 0
        %636 = vmatpush1.bf16.msra.mxu0 0
        %637 = vmatprep.subr.bf16.mxu0 0
        %638 = vmatpush1.bf16.msra.mxu0 0
        %639 = vmatprep.subr.bf16.mxu0 0
        %640 = vmatpush1.bf16.msra.mxu0 0
        %641 = vmatprep.subr.bf16.mxu0 0
        %642 = vmatpush1.bf16.msra.mxu0 0
        %643 = vmatprep.subr.bf16.mxu0 0
        %644 = vmatpush1.bf16.msra.mxu0 0
        %645 = vmatprep.subr.bf16.mxu0 0
        %646 = vmatpush1.bf16.msra.mxu0 0
        %647 = vmatprep.subr.bf16.mxu0 0
        %648 = vmatpush1.bf16.msra.mxu0 0
        %649 = vmatprep.mubr.bf16.mxu0 0
        %650 = vmatmul.mubr.bf16.gmra.mrb[0].mxu0 %v605
        %v651 = vpop.f32.mrb[0].mxu0
        %v652 = vadd.f32 %v576, %v651
        %v653 = vpop.f32.mrb[0].mxu0
        %v654 = vadd.f32 %v576, %v653
        %v655 = vpop.f32.mrb[0].mxu0
        %v656 = vadd.f32 %v581, %v655
        %v657 = vpop.f32.mrb[0].mxu0
        %v658 = vadd.f32 %v581, %v657
        %659 = vmatprep.mubr.bf16.mxu0 0
        %660 = vmatmul.mubr.bf16.gmra.mrb[0].mxu0 %v608
        %v661 = vpop.f32.mrb[0].mxu0
        %v662 = vadd.f32 %v586, %v661
        %v663 = vpop.f32.mrb[0].mxu0
        %v664 = vadd.f32 %v586, %v663
        %v665 = vpop.f32.mrb[0].mxu0
        %v666 = vadd.f32 %v591, %v665
        %v667 = vpop.f32.mrb[0].mxu0
        %v668 = vadd.f32 %v591, %v667
        %669 = vdwg.mxu0
        %v670 = vld [vmem:[#allocation7] sm:$0xff]
        %v671 = vld [vmem:[#allocation7 + $0x8] sm:$0xff]
        %v672 = vld [vmem:[#allocation8] sm:$0xff]
        %v673 = vld [vmem:[#allocation8 + $0x8] sm:$0xff]
        %v674 = vadd.f32 %v652, %v654
        %675 = vadd.xlane.f32.xlu0 %v674
        %v676 = vpop.xlane.xlu0 %675
        %v677 = vrot.slane %v676, 4
        %v678 = vadd.f32 %v676, %v677
        %v679 = vrot.slane %v678, 2
        %v680 = vadd.f32 %v678, %v679
        %v681 = vrot.slane %v680, 1
        %v682 = vadd.f32 %v680, %v681
        %s683 = vtos %v682
        %v684 = vmul.f32 %v652, %v652
        %v685 = vmul.f32 %v654, %v654
        %v686 = vadd.f32 %v684, %v685
        %687 = vadd.xlane.f32.xlu0 %v686
        %v688 = vpop.xlane.xlu0 %687
        %v689 = vrot.slane %v688, 4
        %v690 = vadd.f32 %v688, %v689
        %v691 = vrot.slane %v690, 2
        %v692 = vadd.f32 %v690, %v691
        %v693 = vrot.slane %v692, 1
        %v694 = vadd.f32 %v692, %v693
        %s695 = vtos %v694
        %v696 = vrcp.pop 2048.0
        %s697 = vtos %v696
        %s698 = smul.f32 %s683, %s697
        %v699 = vrcp.pop 2048.0
        %s700 = vtos %v699
        %s701 = smul.f32 %s695, %s700
        %s702 = smul.f32 %s698, %s698
        %s703 = ssub.f32 %s701, %s702
        %v704 = vstv %s698
        %v705 = vsub.f32 %v652, %v704
        %v706 = vsub.f32 %v654, %v704
        %s707 = sadd.f32 %s703, 1e-05
        %v708 = vstv %s707
        %v709 = vrsqrt.pop %v708
        %s710 = vtos %v709
        %v711 = vstv %s710
        %v712 = vmul.f32 %v705, %v711
        %v713 = vmul.f32 %v706, %v711
        %v714 = vmul.f32 %v712, %v670
        %v715 = vmul.f32 %v713, %v671
        %v716 = vadd.f32 %v714, %v672
        %v717 = vadd.f32 %v715, %v673
        %718 = vst [vmem:[%s379] sm:$0xff] %v716
        %719 = vst [vmem:[%s379 + $0x8] sm:$0xff] %v717
        %v720 = vld [vmem:[%s5] sm:$0xff]
        %v721 = vld [vmem:[%s5 + $0x8] sm:$0xff]
        %v722 = vld [vmem:[%s5 + $0x10] sm:$0xff]
        %v723 = vld [vmem:[%s5 + $0x18] sm:$0xff]
        %v724 = vld [vmem:[%s5 + $0x20] sm:$0xff]
        %v725 = vld [vmem:[%s5 + $0x28] sm:$0xff]
        %v726 = vld [vmem:[#allocation10] sm:$0xff]
        %v727 = vld [vmem:[#allocation10 + $0x8] sm:$0xff]
        %v728 = vld [vmem:[#allocation10 + $0x10] sm:$0xff]
        %v729 = vld [vmem:[#allocation10 + $0x18] sm:$0xff]
        %v730 = vld [vmem:[#allocation10 + $0x20] sm:$0xff]
        %v731 = vld [vmem:[#allocation10 + $0x28] sm:$0xff]
        %v732 = vadd.f32 %v656, %v658
        %v733 = vadd.f32 %v732, %v662
        %v734 = vadd.f32 %v733, %v664
        %v735 = vadd.f32 %v734, %v666
        %v736 = vadd.f32 %v735, %v668
        %737 = vadd.xlane.f32.xlu0 %v736
        %v738 = vpop.xlane.xlu0 %737
        %v739 = vrot.slane %v738, 4
        %v740 = vadd.f32 %v738, %v739
        %v741 = vrot.slane %v740, 2
        %v742 = vadd.f32 %v740, %v741
        %v743 = vrot.slane %v742, 1
        %v744 = vadd.f32 %v742, %v743
        %s745 = vtos %v744
        %v746 = vmul.f32 %v656, %v656
        %v747 = vmul.f32 %v658, %v658
        %v748 = vmul.f32 %v662, %v662
        %v749 = vmul.f32 %v664, %v664
        %v750 = vmul.f32 %v666, %v666
        %v751 = vmul.f32 %v668, %v668
        %v752 = vadd.f32 %v746, %v747
        %v753 = vadd.f32 %v752, %v748
        %v754 = vadd.f32 %v753, %v749
        %v755 = vadd.f32 %v754, %v750
        %v756 = vadd.f32 %v755, %v751
        %757 = vadd.xlane.f32.xlu0 %v756
        %v758 = vpop.xlane.xlu0 %757
        %v759 = vrot.slane %v758, 4
        %v760 = vadd.f32 %v758, %v759
        %v761 = vrot.slane %v760, 2
        %v762 = vadd.f32 %v760, %v761
        %v763 = vrot.slane %v762, 1
        %v764 = vadd.f32 %v762, %v763
        %s765 = vtos %v764
        %v766 = vrcp.pop 6144.0
        %s767 = vtos %v766
        %s768 = smul.f32 %s745, %s767
        %v769 = vrcp.pop 6144.0
        %s770 = vtos %v769
        %s771 = smul.f32 %s765, %s770
        %s772 = smul.f32 %s768, %s768
        %s773 = ssub.f32 %s771, %s772
        %v774 = vstv %s768
        %v775 = vsub.f32 %v656, %v774
        %v776 = vsub.f32 %v658, %v774
        %v777 = vsub.f32 %v662, %v774
        %v778 = vsub.f32 %v664, %v774
        %v779 = vsub.f32 %v666, %v774
        %v780 = vsub.f32 %v668, %v774
        %s781 = sadd.f32 %s773, 1e-05
        %v782 = vstv %s781
        %v783 = vrsqrt.pop %v782
        %s784 = vtos %v783
        %v785 = vstv %s784
        %v786 = vmul.f32 %v775, %v785
        %v787 = vmul.f32 %v776, %v785
        %v788 = vmul.f32 %v777, %v785
        %v789 = vmul.f32 %v778, %v785
        %v790 = vmul.f32 %v779, %v785
        %v791 = vmul.f32 %v780, %v785
        %v792 = vmul.f32 %v786, %v720
        %v793 = vmul.f32 %v787, %v721
        %v794 = vmul.f32 %v788, %v722
        %v795 = vmul.f32 %v789, %v723
        %v796 = vmul.f32 %v790, %v724
        %v797 = vmul.f32 %v791, %v725
        %v798 = vadd.f32 %v792, %v726
        %v799 = vadd.f32 %v793, %v727
        %v800 = vadd.f32 %v794, %v728
        %v801 = vadd.f32 %v795, %v729
        %v802 = vadd.f32 %v796, %v730
        %v803 = vadd.f32 %v797, %v731
        %804 = vst [vmem:[%s386] sm:$0xff] %v798
        %805 = vst [vmem:[%s386 + $0x8] sm:$0xff] %v799
        %806 = vst [vmem:[%s386 + $0x10] sm:$0xff] %v800
        %807 = vst [vmem:[%s386 + $0x18] sm:$0xff] %v801
        %808 = vst [vmem:[%s386 + $0x20] sm:$0xff] %v802
        %809 = vst [vmem:[%s386 + $0x28] sm:$0xff] %v803
        %s810 = sand.u32 %s191, 1
        %s811 = scalar_lea.sflag [#allocation4], %s810
        %s812 = sand.u32 %s191, 1
        %s813 = smul.addr %s812, 16
        %s814 = scalar_lea.vmem [#allocation11], %s813
        %s815 = sand.u32 %s217, 1
        %s816 = scalar_lea.sflag [#allocation13], %s815
        %s817 = sand.u32 %s217, 1
        %s818 = smul.addr %s817, 48
        %s819 = scalar_lea.vmem [#allocation12], %s818
        // Predicated region
        $region69: #{tpu_custom_call.1} parent=47 // pred_check
          %p820 = pneg %p201
        $region70: #{tpu_custom_call.1} parent=47 // pred_check_branch
          %822 = sbr.rel (%p820) target = $region72
        $region71: #{tpu_custom_call.1} parent=47 // pred_region
          %s824 = ssub.s32 256, 256
          %825 = vsyncadd %s811, %s824
          %s826 = smul.addr %s31, 2
          %s827 = smul.addr %s826, 128
          %s828 = scalar_lea.hbm %s7, %s827
          %s830 = sshll.u32 %s814, 4
          %s831 = int_to_ptr.vmem [resolvable:$true] %s830
          %833 = dma.vmem_to_hbm [thread:$0]  %s831, 256, %s828, %s811
        $region72: #{tpu_custom_call.1} parent=47 // pred_fallthru
          _
        // Predicated region
        $region73: #{tpu_custom_call.1} parent=47 // pred_check
          %p834 = pneg %p227
        $region74: #{tpu_custom_call.1} parent=47 // pred_check_branch
          %836 = sbr.rel (%p834) target = $region76
        $region75: #{tpu_custom_call.1} parent=47 // pred_region
          %s838 = ssub.s32 768, 768
          %839 = vsyncadd %s816, %s838
          %s840 = smul.addr %s31, 6
          %s841 = smul.addr %s840, 128
          %s842 = scalar_lea.hbm %s8, %s841
          %s843 = sshll.u32 %s819, 4
          %s844 = int_to_ptr.vmem [resolvable:$true] %s843
          %849 = dma.vmem_to_hbm [thread:$0]  %s844, 768, %s842, %s816, 256, 256, 16
        $region76: #{tpu_custom_call.1} parent=47 // pred_fallthru
          _
      $region48: #{tpu_custom_call.1} parent=5 // pred_fallthru
        _
      %p850 = scmp.le.s32.totalorder 2, %s26
      // Predicated region
      $region77: #{tpu_custom_call.1} parent=5 // pred_check
        %p851 = pneg %p850
      $region78: #{tpu_custom_call.1} parent=5 // pred_check_branch
        %853 = sbr.rel (%p851) target = $region80
      $region79: #{tpu_custom_call.1} parent=5 // pred_region
        %s854 = ssub.s32 %s26, 2
        // Predicated region
        $region81: #{tpu_custom_call.1} parent=79 // pred_check
          %p855 = pneg %p207
        $region82: #{tpu_custom_call.1} parent=79 // pred_check_branch
          %857 = sbr.rel (%p855) target = $region84
        $region83: #{tpu_custom_call.1} parent=79 // pred_region
          %s858 = sand.u32 %s192, 1
          %s859 = scalar_lea.sflag [#allocation4], %s858
          %s860 = sand.u32 %s192, 1
          %s861 = smul.addr %s860, 16
          %s862 = scalar_lea.vmem [#allocation11], %s861
          %863 = dma.done %s859, 256
        $region84: #{tpu_custom_call.1} parent=79 // pred_fallthru
          _
        // Predicated region
        $region85: #{tpu_custom_call.1} parent=79 // pred_check
          %p864 = pneg %p233
        $region86: #{tpu_custom_call.1} parent=79 // pred_check_branch
          %866 = sbr.rel (%p864) target = $region88
        $region87: #{tpu_custom_call.1} parent=79 // pred_region
          %s867 = sand.u32 %s218, 1
          %s868 = scalar_lea.sflag [#allocation13], %s867
          %s869 = sand.u32 %s218, 1
          %s870 = smul.addr %s869, 48
          %s871 = scalar_lea.vmem [#allocation12], %s870
          %872 = dma.done %s868, 768
        $region88: #{tpu_custom_call.1} parent=79 // pred_fallthru
          _
      $region80: #{tpu_custom_call.1} parent=5 // pred_fallthru
        _
    $region6: #{tpu_custom_call.1} parent=1 // loop_footer
      %s30 = sadd.s32 1, %s26
    $region7: #{tpu_custom_call.1} parent=1 // loop_footer_branch
      %25 = sbr.rel target = $region3
    $region8: #{tpu_custom_call.1} parent=1 // loop_exit
      _
    %873 = vsyncpa [#allocation3], 1
    %s874 = scalar_lea.sflag [#allocation3], 1
    %875 = vsyncpa %s874, 1
    %876 = vsyncpa [#allocation6], 1
    %877 = vsyncpa [#allocation9], 1
    %878 = vsyncpa [#allocation4], 1
    %s879 = scalar_lea.sflag [#allocation4], 1
    %880 = vsyncpa %s879, 1
    %881 = vsyncpa [#allocation13], 1
    %s882 = scalar_lea.sflag [#allocation13], 1
    %883 = vsyncpa %s882, 1

</llo_original>
